<compile_context>
chip_gen: v7x
topology: tpu7x:2x2x1
jax: 0.10.0
libtpu: 0.0.40
codegen_flags: <defaults>
</compile_context>

<pallas_src>
import functools

import jax
import jax.numpy as jnp
from jax import lax
from jax.experimental import pallas as pl
from jax.experimental.pallas import tpu as pltpu


_INV_SQRT2 = 0.7071067811865476


def _gelu_exact(x):
    # nn.GELU() default = exact erf formulation
    return 0.5 * x * (1.0 + lax.erf(x * _INV_SQRT2))


def _pdconv_fuse_kernel(x1_ref, x2_ref, w1_ref, w2_ref, pwb_ref,
                        dww_ref, dwb_ref, idx_ref, o_ref, *, H, W):
    """One batch element per grid step; all feature tensors are (C, H*W)."""
    C, HW = x1_ref.shape

    x1 = x1_ref[...]
    x2 = x2_ref[...]

    # ---- 1x1 pointwise conv over the (virtually) concatenated channels ----
    # y = W[:, :C] @ x1 + W[:, C:] @ x2 (+ bias) -- no concat materialized.
    if 2 * C <= 32:
        # Tiny contraction: 2C broadcast multiply-adds on the VPU instead of
        # paying MXU fill/drain for a K=2C-deep matmul.
        w1 = w1_ref[...]
        w2 = w2_ref[...]
        y = w1[:, 0:1] * x1[0:1, :]
        for k in range(1, C):
            y = y + w1[:, k:k + 1] * x1[k:k + 1, :]
        for k in range(C):
            y = y + w2[:, k:k + 1] * x2[k:k + 1, :]
    else:
        y = jnp.dot(w1_ref[...], x1, preferred_element_type=jnp.float32)
        y = y + jnp.dot(w2_ref[...], x2, preferred_element_type=jnp.float32)
    y = y + pwb_ref[...]                      # (C, 1) broadcast over lanes

    # ---- exact GELU (lane-dense) ----
    y = _gelu_exact(y)

    # ---- 3x3 depthwise conv with reflect padding, in flattened layout ----
    # out[c, i, j] = b[c] + sum_{di,dj} w[c,di+1,dj+1] * y[c, refl(i+di), refl(j+dj)]
    # With row-major flattening p = i*W + j, reading neighbour (i+a, j+b) is a
    # lane shift of the flat array by a*W + b.  Reflection at the borders only
    # changes WHICH of the 9 shifted arrays is read, so the conv becomes
    # 9 shifts + boundary selects + 9 broadcast FMAs, all lane-dense.

    def shift_read(k):
        # s[p] == y[(p + k) mod HW].  Wrapped values are only ever produced at
        # positions that the boundary selects below overwrite.
        m = k % HW
        if m == 0:
            return y
        return jnp.concatenate([y[:, m:], y[:, :m]], axis=1)

    shifted = {(a, b): shift_read(a * W + b)
               for a in (-1, 0, 1) for b in (-1, 0, 1)}

    row = idx_ref[0:1, :]                     # (1, HW) int32: i = p // W
    col = idx_ref[1:2, :]                     # (1, HW) int32: j = p %  W
    row_first = row == 0
    row_last = row == (H - 1)
    col_first = col == 0
    col_last = col == (W - 1)

    # Column reflection: at j==0 a read of column j-1 becomes j+1; at j==W-1 a
    # read of column j+1 becomes j-1.
    col_fixed = {}
    for a in (-1, 0, 1):
        for b in (-1, 0, 1):
            v = shifted[(a, b)]
            if b == -1:
                v = jnp.where(col_first, shifted[(a, 1)], v)
            elif b == 1:
                v = jnp.where(col_last, shifted[(a, -1)], v)
            col_fixed[(a, b)] = v

    dww = dww_ref[...]                        # (C, 9), tap k = (di+1)*3+(dj+1)
    dwb = dwb_ref[...]                        # (C, 1)

    acc = None
    for di in (-1, 0, 1):
        for dj in (-1, 0, 1):
            v = col_fixed[(di, dj)]
            # Row reflection: at i==0 a read of row i-1 becomes i+1; at i==H-1
            # a read of row i+1 becomes i-1.
            if di == -1:
                v = jnp.where(row_first, col_fixed[(1, dj)], v)
            elif di == 1:
                v = jnp.where(row_last, col_fixed[(-1, dj)], v)
            k = (di + 1) * 3 + (dj + 1)
            term = dww[:, k:k + 1] * v
            if acc is None:
                acc = term + dwb              # fold the bias into the first tap
            else:
                acc = acc + term

    o_ref[...] = acc.astype(o_ref.dtype)


def pdconv_fuse(x1, x2, pw_w, pw_b, dw_w, dw_b):
    """PDConvFuse forward (feature_num=2), NCHW in / NCHW out.

    Args:
      x1, x2: (B, C, H, W) float32 feature maps (PyTorch NCHW layout).
      pw_w:   (C, 2C)   == torch pwconv.weight[:, :, 0, 0]
      pw_b:   (C,)      == torch pwconv.bias
      dw_w:   (C, 3, 3) == torch dwconv.weight[:, 0]
      dw_b:   (C,)      == torch dwconv.bias
    """
    B, C, H, W = x1.shape
    assert x2.shape == (B, C, H, W)
    assert H >= 2 and W >= 2, "reflect padding of 1 needs H, W >= 2"
    HW = H * W

    # Metadata-only reshapes: spatial dims flattened onto the lane axis.
    x1r = x1.reshape(B, C, HW)
    x2r = x2.reshape(B, C, HW)

    w1 = pw_w[:, :C]
    w2 = pw_w[:, C:]
    pw_b2 = pw_b.reshape(C, 1)
    dw_w9 = dw_w.reshape(C, 9)
    dw_b2 = dw_b.reshape(C, 1)

    # Row / column index of every flattened spatial position (tiny, built once).
    pos = jnp.arange(HW, dtype=jnp.int32)
    idx = jnp.stack([pos // W, pos % W], axis=0)          # (2, HW) int32

    kernel = functools.partial(_pdconv_fuse_kernel, H=H, W=W)

    out = pl.pallas_call(
        kernel,
        out_shape=jax.ShapeDtypeStruct((B, C, HW), jnp.float32),
        grid_spec=pltpu.PrefetchScalarGridSpec(
            num_scalar_prefetch=0,
            grid=(B,),
            in_specs=[
                pl.BlockSpec((None, C, HW), lambda b: (b, 0, 0)),   # x1
                pl.BlockSpec((None, C, HW), lambda b: (b, 0, 0)),   # x2
                pl.BlockSpec((C, C), lambda b: (0, 0)),             # pw_w[:, :C]
                pl.BlockSpec((C, C), lambda b: (0, 0)),             # pw_w[:, C:]
                pl.BlockSpec((C, 1), lambda b: (0, 0)),             # pw_b
                pl.BlockSpec((C, 9), lambda b: (0, 0)),             # dw_w
                pl.BlockSpec((C, 1), lambda b: (0, 0)),             # dw_b
                pl.BlockSpec((2, HW), lambda b: (0, 0)),            # row/col idx
            ],
            out_specs=pl.BlockSpec((None, C, HW), lambda b: (b, 0, 0)),
        ),
        compiler_params=pltpu.CompilerParams(
            dimension_semantics=("parallel",)),
    )(x1r, x2r, w1, w2, pw_b2, dw_w9, dw_b2, idx)

    return out.reshape(B, C, H, W)


def _reference(x1, x2, pw_w, pw_b, dw_w, dw_b):
    """Pure-JAX reference with identical math (for validation)."""
    B, C, H, W = x1.shape
    x = jnp.concatenate([x1, x2], axis=1)                          # (B, 2C, H, W)
    y = jnp.einsum('ok,bkhw->bohw', pw_w, x) + pw_b.reshape(1, C, 1, 1)
    y = _gelu_exact(y)
    yp = jnp.pad(y, ((0, 0), (0, 0), (1, 1), (1, 1)), mode='reflect')
    acc = jnp.zeros((B, C, H, W), jnp.float32)
    for di in range(3):
        for dj in range(3):
            acc = acc + yp[:, :, di:di + H, dj:dj + W] * dw_w[:, di, dj].reshape(1, C, 1, 1)
    return acc + dw_b.reshape(1, C, 1, 1)


if __name__ == "__main__":
    B, C, H, W = 2, 4, 16, 16        # in_channels=4, feature_num=2

    key = jax.random.PRNGKey(0)
    k1, k2, k3, k4, k5, k6 = jax.random.split(key, 6)

    x1 = jax.random.normal(k1, (B, C, H, W), jnp.float32)
    x2 = jax.random.normal(k2, (B, C, H, W), jnp.float32)

    # Parameter shapes per the nn.Conv2d definitions:
    #   pwconv.weight (C, 2C, 1, 1) -> pw_w (C, 2C); pwconv.bias (C,)
    #   dwconv.weight (C, 1, 3, 3)  -> dw_w (C, 3, 3); dwconv.bias (C,)
    pw_w = jax.random.normal(k3, (C, 2 * C), jnp.float32) * 0.2
    pw_b = jax.random.normal(k4, (C,), jnp.float32) * 0.1
    dw_w = jax.random.normal(k5, (C, 3, 3), jnp.float32) * 0.2
    dw_b = jax.random.normal(k6, (C,), jnp.float32) * 0.1

    out = jax.block_until_ready(pdconv_fuse(x1, x2, pw_w, pw_b, dw_w, dw_b))
    ref = jax.block_until_ready(_reference(x1, x2, pw_w, pw_b, dw_w, dw_b))

    assert out.shape == (B, C, H, W)
    assert jnp.allclose(out, ref, atol=1e-5, rtol=1e-5), "mismatch vs reference"

    print("KERNEL_OK")
</pallas_src>

<mosaic_0001>
module attributes {stable_mosaic.version = 11 : i64} {
  func.func @_pdconv_fuse_kernel(%arg0: i32, %arg1: memref<1x4x256xf32, #tpu.memory_space<vmem>>, %arg2: memref<1x4x256xf32, #tpu.memory_space<vmem>>, %arg3: memref<4x4xf32, #tpu.memory_space<vmem>>, %arg4: memref<4x4xf32, #tpu.memory_space<vmem>>, %arg5: memref<4x1xf32, #tpu.memory_space<vmem>>, %arg6: memref<4x9xf32, #tpu.memory_space<vmem>>, %arg7: memref<4x1xf32, #tpu.memory_space<vmem>>, %arg8: memref<2x256xi32, #tpu.memory_space<vmem>>, %arg9: memref<1x4x256xf32, #tpu.memory_space<vmem>>) attributes {dimension_semantics = [#tpu.dimension_semantics<parallel>], iteration_bounds = array<i64: 2>, scalar_prefetch = 0 : i64, scratch_operands = 0 : i64, tpu.core_type = #tpu.core_type<tc>, window_params = [{transform_indices = @transform_0, window_bounds = array<i64: 1, 4, 256>}, {transform_indices = @transform_1, window_bounds = array<i64: 1, 4, 256>}, {pipeline_mode = #tpu.pipeline_mode<synchronous>, transform_indices = @transform_2, window_bounds = array<i64: 4, 4>}, {pipeline_mode = #tpu.pipeline_mode<synchronous>, transform_indices = @transform_3, window_bounds = array<i64: 4, 4>}, {pipeline_mode = #tpu.pipeline_mode<synchronous>, transform_indices = @transform_4, window_bounds = array<i64: 4, 1>}, {pipeline_mode = #tpu.pipeline_mode<synchronous>, transform_indices = @transform_5, window_bounds = array<i64: 4, 9>}, {pipeline_mode = #tpu.pipeline_mode<synchronous>, transform_indices = @transform_6, window_bounds = array<i64: 4, 1>}, {pipeline_mode = #tpu.pipeline_mode<synchronous>, transform_indices = @transform_7, window_bounds = array<i64: 2, 256>}, {transform_indices = @transform_8, window_bounds = array<i64: 1, 4, 256>}]} {
    %c0 = arith.constant 0 : index
    %c0_0 = arith.constant 0 : index
    %c0_1 = arith.constant 0 : index
    %0 = vector.load %arg1[%c0, %c0_0, %c0_1] : memref<1x4x256xf32, #tpu.memory_space<vmem>>, vector<1x4x256xf32>
    %1 = vector.shape_cast %0 : vector<1x4x256xf32> to vector<4x256xf32>
    %c0_2 = arith.constant 0 : index
    %c0_3 = arith.constant 0 : index
    %c0_4 = arith.constant 0 : index
    %2 = vector.load %arg2[%c0_2, %c0_3, %c0_4] : memref<1x4x256xf32, #tpu.memory_space<vmem>>, vector<1x4x256xf32>
    %3 = vector.shape_cast %2 : vector<1x4x256xf32> to vector<4x256xf32>
    %c0_5 = arith.constant 0 : index
    %c0_6 = arith.constant 0 : index
    %4 = vector.load %arg3[%c0_5, %c0_6] : memref<4x4xf32, #tpu.memory_space<vmem>>, vector<4x4xf32>
    %c0_7 = arith.constant 0 : index
    %c0_8 = arith.constant 0 : index
    %5 = vector.load %arg4[%c0_7, %c0_8] : memref<4x4xf32, #tpu.memory_space<vmem>>, vector<4x4xf32>
    %6 = vector.extract_strided_slice %4 {offsets = [0, 0], sizes = [4, 1], strides = [1, 1]} : vector<4x4xf32> to vector<4x1xf32>
    %7 = vector.extract_strided_slice %1 {offsets = [0, 0], sizes = [1, 256], strides = [1, 1]} : vector<4x256xf32> to vector<1x256xf32>
    %8 = vector.broadcast %6 : vector<4x1xf32> to vector<4x256xf32>
    %9 = vector.broadcast %7 : vector<1x256xf32> to vector<4x256xf32>
    %10 = arith.mulf %8, %9 : vector<4x256xf32>
    %11 = vector.extract_strided_slice %4 {offsets = [0, 1], sizes = [4, 1], strides = [1, 1]} : vector<4x4xf32> to vector<4x1xf32>
    %12 = vector.extract_strided_slice %1 {offsets = [1, 0], sizes = [1, 256], strides = [1, 1]} : vector<4x256xf32> to vector<1x256xf32>
    %13 = vector.broadcast %11 : vector<4x1xf32> to vector<4x256xf32>
    %14 = vector.broadcast %12 : vector<1x256xf32> to vector<4x256xf32>
    %15 = arith.mulf %13, %14 : vector<4x256xf32>
    %16 = arith.addf %10, %15 : vector<4x256xf32>
    %17 = vector.extract_strided_slice %4 {offsets = [0, 2], sizes = [4, 1], strides = [1, 1]} : vector<4x4xf32> to vector<4x1xf32>
    %18 = vector.extract_strided_slice %1 {offsets = [2, 0], sizes = [1, 256], strides = [1, 1]} : vector<4x256xf32> to vector<1x256xf32>
    %19 = vector.broadcast %17 : vector<4x1xf32> to vector<4x256xf32>
    %20 = vector.broadcast %18 : vector<1x256xf32> to vector<4x256xf32>
    %21 = arith.mulf %19, %20 : vector<4x256xf32>
    %22 = arith.addf %16, %21 : vector<4x256xf32>
    %23 = vector.extract_strided_slice %4 {offsets = [0, 3], sizes = [4, 1], strides = [1, 1]} : vector<4x4xf32> to vector<4x1xf32>
    %24 = vector.extract_strided_slice %1 {offsets = [3, 0], sizes = [1, 256], strides = [1, 1]} : vector<4x256xf32> to vector<1x256xf32>
    %25 = vector.broadcast %23 : vector<4x1xf32> to vector<4x256xf32>
    %26 = vector.broadcast %24 : vector<1x256xf32> to vector<4x256xf32>
    %27 = arith.mulf %25, %26 : vector<4x256xf32>
    %28 = arith.addf %22, %27 : vector<4x256xf32>
    %29 = vector.extract_strided_slice %5 {offsets = [0, 0], sizes = [4, 1], strides = [1, 1]} : vector<4x4xf32> to vector<4x1xf32>
    %30 = vector.extract_strided_slice %3 {offsets = [0, 0], sizes = [1, 256], strides = [1, 1]} : vector<4x256xf32> to vector<1x256xf32>
    %31 = vector.broadcast %29 : vector<4x1xf32> to vector<4x256xf32>
    %32 = vector.broadcast %30 : vector<1x256xf32> to vector<4x256xf32>
    %33 = arith.mulf %31, %32 : vector<4x256xf32>
    %34 = arith.addf %28, %33 : vector<4x256xf32>
    %35 = vector.extract_strided_slice %5 {offsets = [0, 1], sizes = [4, 1], strides = [1, 1]} : vector<4x4xf32> to vector<4x1xf32>
    %36 = vector.extract_strided_slice %3 {offsets = [1, 0], sizes = [1, 256], strides = [1, 1]} : vector<4x256xf32> to vector<1x256xf32>
    %37 = vector.broadcast %35 : vector<4x1xf32> to vector<4x256xf32>
    %38 = vector.broadcast %36 : vector<1x256xf32> to vector<4x256xf32>
    %39 = arith.mulf %37, %38 : vector<4x256xf32>
    %40 = arith.addf %34, %39 : vector<4x256xf32>
    %41 = vector.extract_strided_slice %5 {offsets = [0, 2], sizes = [4, 1], strides = [1, 1]} : vector<4x4xf32> to vector<4x1xf32>
    %42 = vector.extract_strided_slice %3 {offsets = [2, 0], sizes = [1, 256], strides = [1, 1]} : vector<4x256xf32> to vector<1x256xf32>
    %43 = vector.broadcast %41 : vector<4x1xf32> to vector<4x256xf32>
    %44 = vector.broadcast %42 : vector<1x256xf32> to vector<4x256xf32>
    %45 = arith.mulf %43, %44 : vector<4x256xf32>
    %46 = arith.addf %40, %45 : vector<4x256xf32>
    %47 = vector.extract_strided_slice %5 {offsets = [0, 3], sizes = [4, 1], strides = [1, 1]} : vector<4x4xf32> to vector<4x1xf32>
    %48 = vector.extract_strided_slice %3 {offsets = [3, 0], sizes = [1, 256], strides = [1, 1]} : vector<4x256xf32> to vector<1x256xf32>
    %49 = vector.broadcast %47 : vector<4x1xf32> to vector<4x256xf32>
    %50 = vector.broadcast %48 : vector<1x256xf32> to vector<4x256xf32>
    %51 = arith.mulf %49, %50 : vector<4x256xf32>
    %52 = arith.addf %46, %51 : vector<4x256xf32>
    %c0_9 = arith.constant 0 : index
    %c0_10 = arith.constant 0 : index
    %53 = vector.load %arg5[%c0_9, %c0_10] : memref<4x1xf32, #tpu.memory_space<vmem>>, vector<4x1xf32>
    %54 = vector.broadcast %53 : vector<4x1xf32> to vector<4x256xf32>
    %55 = arith.addf %52, %54 : vector<4x256xf32>
    %cst = arith.constant 5.000000e-01 : f32
    %56 = vector.broadcast %cst : f32 to vector<4x256xf32>
    %57 = arith.mulf %56, %55 : vector<4x256xf32>
    %cst_11 = arith.constant 0.707106769 : f32
    %58 = vector.broadcast %cst_11 : f32 to vector<4x256xf32>
    %59 = arith.mulf %55, %58 : vector<4x256xf32>
    %60 = math.erf %59 : vector<4x256xf32>
    %cst_12 = arith.constant 1.000000e+00 : f32
    %61 = vector.broadcast %cst_12 : f32 to vector<4x256xf32>
    %62 = arith.addf %61, %60 : vector<4x256xf32>
    %63 = arith.mulf %57, %62 : vector<4x256xf32>
    %64 = vector.extract_strided_slice %63 {offsets = [0, 239], sizes = [4, 17], strides = [1, 1]} : vector<4x256xf32> to vector<4x17xf32>
    %65 = vector.extract_strided_slice %63 {offsets = [0, 0], sizes = [4, 239], strides = [1, 1]} : vector<4x256xf32> to vector<4x239xf32>
    %66 = tpu.concatenate %64, %65 in 1 : vector<4x17xf32>, vector<4x239xf32> -> vector<4x256xf32>
    %67 = vector.extract_strided_slice %63 {offsets = [0, 240], sizes = [4, 16], strides = [1, 1]} : vector<4x256xf32> to vector<4x16xf32>
    %68 = vector.extract_strided_slice %63 {offsets = [0, 0], sizes = [4, 240], strides = [1, 1]} : vector<4x256xf32> to vector<4x240xf32>
    %69 = tpu.concatenate %67, %68 in 1 : vector<4x16xf32>, vector<4x240xf32> -> vector<4x256xf32>
    %70 = vector.extract_strided_slice %63 {offsets = [0, 241], sizes = [4, 15], strides = [1, 1]} : vector<4x256xf32> to vector<4x15xf32>
    %71 = vector.extract_strided_slice %63 {offsets = [0, 0], sizes = [4, 241], strides = [1, 1]} : vector<4x256xf32> to vector<4x241xf32>
    %72 = tpu.concatenate %70, %71 in 1 : vector<4x15xf32>, vector<4x241xf32> -> vector<4x256xf32>
    %73 = vector.extract_strided_slice %63 {offsets = [0, 255], sizes = [4, 1], strides = [1, 1]} : vector<4x256xf32> to vector<4x1xf32>
    %74 = vector.extract_strided_slice %63 {offsets = [0, 0], sizes = [4, 255], strides = [1, 1]} : vector<4x256xf32> to vector<4x255xf32>
    %75 = tpu.concatenate %73, %74 in 1 : vector<4x1xf32>, vector<4x255xf32> -> vector<4x256xf32>
    %76 = vector.extract_strided_slice %63 {offsets = [0, 1], sizes = [4, 255], strides = [1, 1]} : vector<4x256xf32> to vector<4x255xf32>
    %77 = vector.extract_strided_slice %63 {offsets = [0, 0], sizes = [4, 1], strides = [1, 1]} : vector<4x256xf32> to vector<4x1xf32>
    %78 = tpu.concatenate %76, %77 in 1 : vector<4x255xf32>, vector<4x1xf32> -> vector<4x256xf32>
    %79 = vector.extract_strided_slice %63 {offsets = [0, 15], sizes = [4, 241], strides = [1, 1]} : vector<4x256xf32> to vector<4x241xf32>
    %80 = vector.extract_strided_slice %63 {offsets = [0, 0], sizes = [4, 15], strides = [1, 1]} : vector<4x256xf32> to vector<4x15xf32>
    %81 = tpu.concatenate %79, %80 in 1 : vector<4x241xf32>, vector<4x15xf32> -> vector<4x256xf32>
    %82 = vector.extract_strided_slice %63 {offsets = [0, 16], sizes = [4, 240], strides = [1, 1]} : vector<4x256xf32> to vector<4x240xf32>
    %83 = vector.extract_strided_slice %63 {offsets = [0, 0], sizes = [4, 16], strides = [1, 1]} : vector<4x256xf32> to vector<4x16xf32>
    %84 = tpu.concatenate %82, %83 in 1 : vector<4x240xf32>, vector<4x16xf32> -> vector<4x256xf32>
    %85 = vector.extract_strided_slice %63 {offsets = [0, 17], sizes = [4, 239], strides = [1, 1]} : vector<4x256xf32> to vector<4x239xf32>
    %86 = vector.extract_strided_slice %63 {offsets = [0, 0], sizes = [4, 17], strides = [1, 1]} : vector<4x256xf32> to vector<4x17xf32>
    %87 = tpu.concatenate %85, %86 in 1 : vector<4x239xf32>, vector<4x17xf32> -> vector<4x256xf32>
    %c0_13 = arith.constant 0 : index
    %c0_14 = arith.constant 0 : index
    %88 = vector.load %arg8[%c0_13, %c0_14] : memref<2x256xi32, #tpu.memory_space<vmem>>, vector<1x256xi32>
    %c1 = arith.constant 1 : index
    %c0_15 = arith.constant 0 : index
    %89 = vector.load %arg8[%c1, %c0_15] : memref<2x256xi32, #tpu.memory_space<vmem>>, vector<1x256xi32>
    %c0_i32 = arith.constant 0 : i32
    %90 = vector.broadcast %c0_i32 : i32 to vector<1x256xi32>
    %91 = arith.cmpi eq, %88, %90 : vector<1x256xi32>
    %c15_i32 = arith.constant 15 : i32
    %92 = vector.broadcast %c15_i32 : i32 to vector<1x256xi32>
    %93 = arith.cmpi eq, %88, %92 : vector<1x256xi32>
    %c0_i32_16 = arith.constant 0 : i32
    %94 = vector.broadcast %c0_i32_16 : i32 to vector<1x256xi32>
    %95 = arith.cmpi eq, %89, %94 : vector<1x256xi32>
    %c15_i32_17 = arith.constant 15 : i32
    %96 = vector.broadcast %c15_i32_17 : i32 to vector<1x256xi32>
    %97 = arith.cmpi eq, %89, %96 : vector<1x256xi32>
    %98 = vector.shape_cast %95 : vector<1x256xi1> to vector<1x256xi1>
    %99 = vector.broadcast %98 : vector<1x256xi1> to vector<4x256xi1>
    %100 = arith.select %99, %72, %66 : vector<4x256xi1>, vector<4x256xf32>
    %101 = vector.shape_cast %97 : vector<1x256xi1> to vector<1x256xi1>
    %102 = vector.broadcast %101 : vector<1x256xi1> to vector<4x256xi1>
    %103 = arith.select %102, %66, %72 : vector<4x256xi1>, vector<4x256xf32>
    %104 = vector.shape_cast %95 : vector<1x256xi1> to vector<1x256xi1>
    %105 = vector.broadcast %104 : vector<1x256xi1> to vector<4x256xi1>
    %106 = arith.select %105, %78, %75 : vector<4x256xi1>, vector<4x256xf32>
    %107 = vector.shape_cast %97 : vector<1x256xi1> to vector<1x256xi1>
    %108 = vector.broadcast %107 : vector<1x256xi1> to vector<4x256xi1>
    %109 = arith.select %108, %75, %78 : vector<4x256xi1>, vector<4x256xf32>
    %110 = vector.shape_cast %95 : vector<1x256xi1> to vector<1x256xi1>
    %111 = vector.broadcast %110 : vector<1x256xi1> to vector<4x256xi1>
    %112 = arith.select %111, %87, %81 : vector<4x256xi1>, vector<4x256xf32>
    %113 = vector.shape_cast %97 : vector<1x256xi1> to vector<1x256xi1>
    %114 = vector.broadcast %113 : vector<1x256xi1> to vector<4x256xi1>
    %115 = arith.select %114, %81, %87 : vector<4x256xi1>, vector<4x256xf32>
    %c0_18 = arith.constant 0 : index
    %c0_19 = arith.constant 0 : index
    %116 = vector.load %arg6[%c0_18, %c0_19] : memref<4x9xf32, #tpu.memory_space<vmem>>, vector<4x9xf32>
    %c0_20 = arith.constant 0 : index
    %c0_21 = arith.constant 0 : index
    %117 = vector.load %arg7[%c0_20, %c0_21] : memref<4x1xf32, #tpu.memory_space<vmem>>, vector<4x1xf32>
    %118 = vector.shape_cast %91 : vector<1x256xi1> to vector<1x256xi1>
    %119 = vector.broadcast %118 : vector<1x256xi1> to vector<4x256xi1>
    %120 = arith.select %119, %112, %100 : vector<4x256xi1>, vector<4x256xf32>
    %121 = vector.extract_strided_slice %116 {offsets = [0, 0], sizes = [4, 1], strides = [1, 1]} : vector<4x9xf32> to vector<4x1xf32>
    %122 = vector.broadcast %121 : vector<4x1xf32> to vector<4x256xf32>
    %123 = arith.mulf %122, %120 : vector<4x256xf32>
    %124 = vector.broadcast %117 : vector<4x1xf32> to vector<4x256xf32>
    %125 = arith.addf %123, %124 : vector<4x256xf32>
    %126 = vector.shape_cast %91 : vector<1x256xi1> to vector<1x256xi1>
    %127 = vector.broadcast %126 : vector<1x256xi1> to vector<4x256xi1>
    %128 = arith.select %127, %84, %69 : vector<4x256xi1>, vector<4x256xf32>
    %129 = vector.extract_strided_slice %116 {offsets = [0, 1], sizes = [4, 1], strides = [1, 1]} : vector<4x9xf32> to vector<4x1xf32>
    %130 = vector.broadcast %129 : vector<4x1xf32> to vector<4x256xf32>
    %131 = arith.mulf %130, %128 : vector<4x256xf32>
    %132 = arith.addf %125, %131 : vector<4x256xf32>
    %133 = vector.shape_cast %91 : vector<1x256xi1> to vector<1x256xi1>
    %134 = vector.broadcast %133 : vector<1x256xi1> to vector<4x256xi1>
    %135 = arith.select %134, %115, %103 : vector<4x256xi1>, vector<4x256xf32>
    %136 = vector.extract_strided_slice %116 {offsets = [0, 2], sizes = [4, 1], strides = [1, 1]} : vector<4x9xf32> to vector<4x1xf32>
    %137 = vector.broadcast %136 : vector<4x1xf32> to vector<4x256xf32>
    %138 = arith.mulf %137, %135 : vector<4x256xf32>
    %139 = arith.addf %132, %138 : vector<4x256xf32>
    %140 = vector.extract_strided_slice %116 {offsets = [0, 3], sizes = [4, 1], strides = [1, 1]} : vector<4x9xf32> to vector<4x1xf32>
    %141 = vector.broadcast %140 : vector<4x1xf32> to vector<4x256xf32>
    %142 = arith.mulf %141, %106 : vector<4x256xf32>
    %143 = arith.addf %139, %142 : vector<4x256xf32>
    %144 = vector.extract_strided_slice %116 {offsets = [0, 4], sizes = [4, 1], strides = [1, 1]} : vector<4x9xf32> to vector<4x1xf32>
    %145 = vector.broadcast %144 : vector<4x1xf32> to vector<4x256xf32>
    %146 = arith.mulf %145, %63 : vector<4x256xf32>
    %147 = arith.addf %143, %146 : vector<4x256xf32>
    %148 = vector.extract_strided_slice %116 {offsets = [0, 5], sizes = [4, 1], strides = [1, 1]} : vector<4x9xf32> to vector<4x1xf32>
    %149 = vector.broadcast %148 : vector<4x1xf32> to vector<4x256xf32>
    %150 = arith.mulf %149, %109 : vector<4x256xf32>
    %151 = arith.addf %147, %150 : vector<4x256xf32>
    %152 = vector.shape_cast %93 : vector<1x256xi1> to vector<1x256xi1>
    %153 = vector.broadcast %152 : vector<1x256xi1> to vector<4x256xi1>
    %154 = arith.select %153, %100, %112 : vector<4x256xi1>, vector<4x256xf32>
    %155 = vector.extract_strided_slice %116 {offsets = [0, 6], sizes = [4, 1], strides = [1, 1]} : vector<4x9xf32> to vector<4x1xf32>
    %156 = vector.broadcast %155 : vector<4x1xf32> to vector<4x256xf32>
    %157 = arith.mulf %156, %154 : vector<4x256xf32>
    %158 = arith.addf %151, %157 : vector<4x256xf32>
    %159 = vector.shape_cast %93 : vector<1x256xi1> to vector<1x256xi1>
    %160 = vector.broadcast %159 : vector<1x256xi1> to vector<4x256xi1>
    %161 = arith.select %160, %69, %84 : vector<4x256xi1>, vector<4x256xf32>
    %162 = vector.extract_strided_slice %116 {offsets = [0, 7], sizes = [4, 1], strides = [1, 1]} : vector<4x9xf32> to vector<4x1xf32>
    %163 = vector.broadcast %162 : vector<4x1xf32> to vector<4x256xf32>
    %164 = arith.mulf %163, %161 : vector<4x256xf32>
    %165 = arith.addf %158, %164 : vector<4x256xf32>
    %166 = vector.shape_cast %93 : vector<1x256xi1> to vector<1x256xi1>
    %167 = vector.broadcast %166 : vector<1x256xi1> to vector<4x256xi1>
    %168 = arith.select %167, %103, %115 : vector<4x256xi1>, vector<4x256xf32>
    %169 = vector.extract_strided_slice %116 {offsets = [0, 8], sizes = [4, 1], strides = [1, 1]} : vector<4x9xf32> to vector<4x1xf32>
    %170 = vector.broadcast %169 : vector<4x1xf32> to vector<4x256xf32>
    %171 = arith.mulf %170, %168 : vector<4x256xf32>
    %172 = arith.addf %165, %171 : vector<4x256xf32>
    %c0_22 = arith.constant 0 : index
    %c0_23 = arith.constant 0 : index
    %c0_24 = arith.constant 0 : index
    %173 = vector.load %arg9[%c0_22, %c0_23, %c0_24] : memref<1x4x256xf32, #tpu.memory_space<vmem>>, vector<1x4x256xf32>
    %174 = vector.shape_cast %173 : vector<1x4x256xf32> to vector<4x256xf32>
    %175 = vector.shape_cast %172 : vector<4x256xf32> to vector<1x4x256xf32>
    tpu.vector_store %arg9[%c0_22, %c0_23, %c0_24], %175 {strides = array<i32>} : memref<1x4x256xf32, #tpu.memory_space<vmem>>, vector<1x4x256xf32>,
    return
  }
  func.func @transform_0(%arg0: i32) -> (i32, i32, i32) {
    %c0_i32 = arith.constant 0 : i32
    %c0_i32_0 = arith.constant 0 : i32
    %c0_i32_1 = arith.constant 0 : i32
    return %arg0, %c0_i32, %c0_i32_0 : i32, i32, i32
  }
  func.func @transform_1(%arg0: i32) -> (i32, i32, i32) {
    %c0_i32 = arith.constant 0 : i32
    %c0_i32_0 = arith.constant 0 : i32
    %c0_i32_1 = arith.constant 0 : i32
    return %arg0, %c0_i32, %c0_i32_0 : i32, i32, i32
  }
  func.func @transform_2(%arg0: i32) -> (i32, i32) {
    %c0_i32 = arith.constant 0 : i32
    %c0_i32_0 = arith.constant 0 : i32
    %c0_i32_1 = arith.constant 0 : i32
    return %c0_i32, %c0_i32_0 : i32, i32
  }
  func.func @transform_3(%arg0: i32) -> (i32, i32) {
    %c0_i32 = arith.constant 0 : i32
    %c0_i32_0 = arith.constant 0 : i32
    %c0_i32_1 = arith.constant 0 : i32
    return %c0_i32, %c0_i32_0 : i32, i32
  }
  func.func @transform_4(%arg0: i32) -> (i32, i32) {
    %c0_i32 = arith.constant 0 : i32
    %c0_i32_0 = arith.constant 0 : i32
    %c0_i32_1 = arith.constant 0 : i32
    return %c0_i32, %c0_i32_0 : i32, i32
  }
  func.func @transform_5(%arg0: i32) -> (i32, i32) {
    %c0_i32 = arith.constant 0 : i32
    %c0_i32_0 = arith.constant 0 : i32
    %c0_i32_1 = arith.constant 0 : i32
    return %c0_i32, %c0_i32_0 : i32, i32
  }
  func.func @transform_6(%arg0: i32) -> (i32, i32) {
    %c0_i32 = arith.constant 0 : i32
    %c0_i32_0 = arith.constant 0 : i32
    %c0_i32_1 = arith.constant 0 : i32
    return %c0_i32, %c0_i32_0 : i32, i32
  }
  func.func @transform_7(%arg0: i32) -> (i32, i32) {
    %c0_i32 = arith.constant 0 : i32
    %c0_i32_0 = arith.constant 0 : i32
    %c0_i32_1 = arith.constant 0 : i32
    return %c0_i32, %c0_i32_0 : i32, i32
  }
  func.func @transform_8(%arg0: i32) -> (i32, i32, i32) {
    %c0_i32 = arith.constant 0 : i32
    %c0_i32_0 = arith.constant 0 : i32
    %c0_i32_1 = arith.constant 0 : i32
    return %arg0, %c0_i32, %c0_i32_0 : i32, i32, i32
  }
}

</mosaic_0001>

<llo_original>
// kernel: tpu_custom_call.1
$region0: #{tpu_custom_call.1}
  #allocation0 [shape = 'u32[]', space=smem, size = 0x4, offset = 0x4, fixed_abs, tag = 'smem constant byte address 0x4 - core index']
  #allocation1 [shape = 'u32[144,128]{1,0:T(1,128)}', space=vmem, size = 0x12000, scoped, tag = 'internal scratch']
  %s0 = inlined_call_operand.hbm [shape: f32[2,4,256], index: 0, kind: input, shape index: {}]
  %s1 = inlined_call_operand.hbm [shape: f32[2,4,256], index: 1, kind: input, shape index: {}]
  %s2 = inlined_call_operand.vmem [shape: f32[4,4], index: 2, kind: input, shape index: {}]
  %s3 = inlined_call_operand.vmem [shape: f32[4,4], index: 3, kind: input, shape index: {}]
  %s4 = inlined_call_operand.vmem [shape: f32[4,1], index: 4, kind: input, shape index: {}]
  %s5 = inlined_call_operand.vmem [shape: f32[4,9], index: 5, kind: input, shape index: {}]
  %s6 = inlined_call_operand.vmem [shape: f32[4,1], index: 6, kind: input, shape index: {}]
  %s7 = inlined_call_operand.vmem [shape: s32[2,256], index: 7, kind: input, shape index: {}]
  %s8 = inlined_call_operand.hbm [shape: f32[2,4,256], index: 8, kind: output, shape index: {}]
  %s9 = sld [smem:[#allocation0]]
  $region73: #{tpu_custom_call.1} parent=0
    _
  %s11 = ssub.s32 1, %s9
  %s12 = scalar_select 0, %s11, %s9
  $region1: #{tpu_custom_call.1} parent=0
    #allocation2 [shape = 'u8[8192]{0}', space=vmem, size = 0x2000, scoped, tag = 'input window, operand 0']
    #allocation3 [shape = 's32[2]{0}', space=sflag, size = 0x8, scoped, tag = 'scoped memory for tpu_custom_call.1']
    #allocation4 [shape = 's32[2]{0}', space=sflag, size = 0x8, scoped, tag = 'scoped memory for tpu_custom_call.1']
    #allocation5 [shape = 'u8[8192]{0}', space=vmem, size = 0x2000, scoped, tag = 'input window, operand 1']
    #allocation6 [shape = 's32[2]{0}', space=sflag, size = 0x8, scoped, tag = 'scoped memory for tpu_custom_call.1']
    #allocation7 [shape = 'u8[8192]{0}', space=vmem, size = 0x2000, scoped, tag = 'output window, operand 0']
    %13 = vsyncpa [#allocation3], 0
    %s14 = scalar_lea.sflag [#allocation3], 1
    %15 = vsyncpa %s14, 0
    %16 = vsyncpa [#allocation6], 0
    %s17 = scalar_lea.sflag [#allocation6], 1
    %18 = vsyncpa %s17, 0
    %19 = vsyncpa [#allocation4], 0
    %s20 = scalar_lea.sflag [#allocation4], 1
    %21 = vsyncpa %s20, 0
    loop: start=0, step=1, limit=4
    $region2: #{tpu_custom_call.1} parent=1 // loop_pre_header
      _
    $region3: #{tpu_custom_call.1} parent=1 // loop_header
      %s23 = sphi 0, %s27
      %p24 = scmp.ge.s32.totalorder %s23, 4
      %s33 = sphi 0, %s35
      %s36 = sphi 0, %s33
      %s37 = sphi 0, %s36
      %s53 = sphi 0, %s37
      %s59 = sphi 0, %s61
      %s62 = sphi 0, %s59
      %s63 = sphi 0, %s62
      %s79 = sphi 0, %s63
      %s83 = sphi 0, %s83
      %s85 = sphi 0, %s83
      %s86 = sphi 0, %s85
      %s100 = sphi 0, %s86
      %s104 = sphi 0, %s104
      %s106 = sphi 0, %s104
      %s107 = sphi 0, %s106
      %s121 = sphi 0, %s107
      %s125 = sphi 0, %s125
      %s127 = sphi 0, %s125
      %s128 = sphi 0, %s127
      %s142 = sphi 0, %s128
      %s146 = sphi 0, %s146
      %s148 = sphi 0, %s146
      %s149 = sphi 0, %s148
      %s163 = sphi 0, %s149
      %s167 = sphi 0, %s167
      %s169 = sphi 0, %s167
      %s170 = sphi 0, %s169
      %s184 = sphi 0, %s170
      %s188 = sphi 0, %s188
      %s190 = sphi 0, %s188
      %s191 = sphi 0, %s190
      %s205 = sphi 0, %s191
      %s211 = sphi 0, %s213
      %s214 = sphi 0, %s211
      %s215 = sphi 0, %s214
      %s231 = sphi 0, %s215
    $region4: #{tpu_custom_call.1} parent=1 // loop_header_branch
      %26 = sbr.rel (%p24) target = $region8
    $region5: #{tpu_custom_call.1} parent=1 // loop_body
      %s28 = ssub.s32 %s23, 1
      %s29 = ssub.s32 %s23, 2
      %s30 = sadd.s32 %s23, 1
      %s31 = ssub.s32 %s23, %s30
      %p32 = scmp.eq.s32.totalorder %s31, 0
      %s34 = sadd.s32 %s33, 1
      %s35 = scalar_select %p32, %s33, %s34
      %p38 = pneg %p32
      %p39 = scmp.eq.s32.totalorder %s23, 1
      %p40 = por %p38, %p39
      %p41 = scmp.ne.s32.totalorder %s33, %s36
      %p42 = scmp.eq.s32.totalorder %s23, 0
      %p43 = por %p41, %p42
      %p44 = scmp.ne.s32.totalorder %s33, %s36
      %p45 = scmp.eq.s32.totalorder %s28, 1
      %p46 = por %p44, %p45
      %p47 = scmp.ne.s32.totalorder %s36, %s37
      %p48 = scmp.eq.s32.totalorder %s28, 0
      %p49 = por %p47, %p48
      %p50 = scmp.ne.s32.totalorder %s36, %s37
      %p51 = scmp.eq.s32.totalorder %s29, 1
      %p52 = por %p50, %p51
      %p54 = scmp.ne.s32.totalorder %s37, %s53
      %p55 = scmp.eq.s32.totalorder %s29, 0
      %p56 = por %p54, %p55
      %s57 = ssub.s32 %s23, %s30
      %p58 = scmp.eq.s32.totalorder %s57, 0
      %s60 = sadd.s32 %s59, 1
      %s61 = scalar_select %p58, %s59, %s60
      %p64 = pneg %p58
      %p65 = scmp.eq.s32.totalorder %s23, 1
      %p66 = por %p64, %p65
      %p67 = scmp.ne.s32.totalorder %s59, %s62
      %p68 = scmp.eq.s32.totalorder %s23, 0
      %p69 = por %p67, %p68
      %p70 = scmp.ne.s32.totalorder %s59, %s62
      %p71 = scmp.eq.s32.totalorder %s28, 1
      %p72 = por %p70, %p71
      %p73 = scmp.ne.s32.totalorder %s62, %s63
      %p74 = scmp.eq.s32.totalorder %s28, 0
      %p75 = por %p73, %p74
      %p76 = scmp.ne.s32.totalorder %s62, %s63
      %p77 = scmp.eq.s32.totalorder %s29, 1
      %p78 = por %p76, %p77
      %p80 = scmp.ne.s32.totalorder %s63, %s79
      %p81 = scmp.eq.s32.totalorder %s29, 0
      %p82 = por %p80, %p81
      %s84 = sadd.s32 %s83, 1
      %p87 = scmp.eq.s32.totalorder %s23, 1
      %p88 = scmp.ne.s32.totalorder %s83, %s85
      %p89 = scmp.eq.s32.totalorder %s23, 0
      %p90 = por %p88, %p89
      %p91 = scmp.ne.s32.totalorder %s83, %s85
      %p92 = scmp.eq.s32.totalorder %s28, 1
      %p93 = por %p91, %p92
      %p94 = scmp.ne.s32.totalorder %s85, %s86
      %p95 = scmp.eq.s32.totalorder %s28, 0
      %p96 = por %p94, %p95
      %p97 = scmp.ne.s32.totalorder %s85, %s86
      %p98 = scmp.eq.s32.totalorder %s29, 1
      %p99 = por %p97, %p98
      %p101 = scmp.ne.s32.totalorder %s86, %s100
      %p102 = scmp.eq.s32.totalorder %s29, 0
      %p103 = por %p101, %p102
      %s105 = sadd.s32 %s104, 1
      %p108 = scmp.eq.s32.totalorder %s23, 1
      %p109 = scmp.ne.s32.totalorder %s104, %s106
      %p110 = scmp.eq.s32.totalorder %s23, 0
      %p111 = por %p109, %p110
      %p112 = scmp.ne.s32.totalorder %s104, %s106
      %p113 = scmp.eq.s32.totalorder %s28, 1
      %p114 = por %p112, %p113
      %p115 = scmp.ne.s32.totalorder %s106, %s107
      %p116 = scmp.eq.s32.totalorder %s28, 0
      %p117 = por %p115, %p116
      %p118 = scmp.ne.s32.totalorder %s106, %s107
      %p119 = scmp.eq.s32.totalorder %s29, 1
      %p120 = por %p118, %p119
      %p122 = scmp.ne.s32.totalorder %s107, %s121
      %p123 = scmp.eq.s32.totalorder %s29, 0
      %p124 = por %p122, %p123
      %s126 = sadd.s32 %s125, 1
      %p129 = scmp.eq.s32.totalorder %s23, 1
      %p130 = scmp.ne.s32.totalorder %s125, %s127
      %p131 = scmp.eq.s32.totalorder %s23, 0
      %p132 = por %p130, %p131
      %p133 = scmp.ne.s32.totalorder %s125, %s127
      %p134 = scmp.eq.s32.totalorder %s28, 1
      %p135 = por %p133, %p134
      %p136 = scmp.ne.s32.totalorder %s127, %s128
      %p137 = scmp.eq.s32.totalorder %s28, 0
      %p138 = por %p136, %p137
      %p139 = scmp.ne.s32.totalorder %s127, %s128
      %p140 = scmp.eq.s32.totalorder %s29, 1
      %p141 = por %p139, %p140
      %p143 = scmp.ne.s32.totalorder %s128, %s142
      %p144 = scmp.eq.s32.totalorder %s29, 0
      %p145 = por %p143, %p144
      %s147 = sadd.s32 %s146, 1
      %p150 = scmp.eq.s32.totalorder %s23, 1
      %p151 = scmp.ne.s32.totalorder %s146, %s148
      %p152 = scmp.eq.s32.totalorder %s23, 0
      %p153 = por %p151, %p152
      %p154 = scmp.ne.s32.totalorder %s146, %s148
      %p155 = scmp.eq.s32.totalorder %s28, 1
      %p156 = por %p154, %p155
      %p157 = scmp.ne.s32.totalorder %s148, %s149
      %p158 = scmp.eq.s32.totalorder %s28, 0
      %p159 = por %p157, %p158
      %p160 = scmp.ne.s32.totalorder %s148, %s149
      %p161 = scmp.eq.s32.totalorder %s29, 1
      %p162 = por %p160, %p161
      %p164 = scmp.ne.s32.totalorder %s149, %s163
      %p165 = scmp.eq.s32.totalorder %s29, 0
      %p166 = por %p164, %p165
      %s168 = sadd.s32 %s167, 1
      %p171 = scmp.eq.s32.totalorder %s23, 1
      %p172 = scmp.ne.s32.totalorder %s167, %s169
      %p173 = scmp.eq.s32.totalorder %s23, 0
      %p174 = por %p172, %p173
      %p175 = scmp.ne.s32.totalorder %s167, %s169
      %p176 = scmp.eq.s32.totalorder %s28, 1
      %p177 = por %p175, %p176
      %p178 = scmp.ne.s32.totalorder %s169, %s170
      %p179 = scmp.eq.s32.totalorder %s28, 0
      %p180 = por %p178, %p179
      %p181 = scmp.ne.s32.totalorder %s169, %s170
      %p182 = scmp.eq.s32.totalorder %s29, 1
      %p183 = por %p181, %p182
      %p185 = scmp.ne.s32.totalorder %s170, %s184
      %p186 = scmp.eq.s32.totalorder %s29, 0
      %p187 = por %p185, %p186
      %s189 = sadd.s32 %s188, 1
      %p192 = scmp.eq.s32.totalorder %s23, 1
      %p193 = scmp.ne.s32.totalorder %s188, %s190
      %p194 = scmp.eq.s32.totalorder %s23, 0
      %p195 = por %p193, %p194
      %p196 = scmp.ne.s32.totalorder %s188, %s190
      %p197 = scmp.eq.s32.totalorder %s28, 1
      %p198 = por %p196, %p197
      %p199 = scmp.ne.s32.totalorder %s190, %s191
      %p200 = scmp.eq.s32.totalorder %s28, 0
      %p201 = por %p199, %p200
      %p202 = scmp.ne.s32.totalorder %s190, %s191
      %p203 = scmp.eq.s32.totalorder %s29, 1
      %p204 = por %p202, %p203
      %p206 = scmp.ne.s32.totalorder %s191, %s205
      %p207 = scmp.eq.s32.totalorder %s29, 0
      %p208 = por %p206, %p207
      %s209 = ssub.s32 %s23, %s30
      %p210 = scmp.eq.s32.totalorder %s209, 0
      %s212 = sadd.s32 %s211, 1
      %s213 = scalar_select %p210, %s211, %s212
      %p216 = pneg %p210
      %p217 = scmp.eq.s32.totalorder %s23, 1
      %p218 = por %p216, %p217
      %p219 = scmp.ne.s32.totalorder %s211, %s214
      %p220 = scmp.eq.s32.totalorder %s23, 0
      %p221 = por %p219, %p220
      %p222 = scmp.ne.s32.totalorder %s211, %s214
      %p223 = scmp.eq.s32.totalorder %s28, 1
      %p224 = por %p222, %p223
      %p225 = scmp.ne.s32.totalorder %s214, %s215
      %p226 = scmp.eq.s32.totalorder %s28, 0
      %p227 = por %p225, %p226
      %p228 = scmp.ne.s32.totalorder %s214, %s215
      %p229 = scmp.eq.s32.totalorder %s29, 1
      %p230 = por %p228, %p229
      %p232 = scmp.ne.s32.totalorder %s215, %s231
      %p233 = scmp.eq.s32.totalorder %s29, 0
      %p234 = por %p232, %p233
      %p235 = scmp.le.s32.totalorder 1, %s23
      %p236 = scmp.lt.s32.totalorder %s23, 3
      %p237 = pnand %p235, %p236
      %p238 = pneg %p237
      // Predicated region
      $region9: #{tpu_custom_call.1} parent=5 // pred_check
        _
      $region10: #{tpu_custom_call.1} parent=5 // pred_check_branch
        %240 = sbr.rel (%p237) target = $region12
      $region11: #{tpu_custom_call.1} parent=5 // pred_region
        %s241 = ssub.s32 %s23, 1
        // Predicated region
        $region13: #{tpu_custom_call.1} parent=11 // pred_check
          %p242 = pneg %p96
        $region14: #{tpu_custom_call.1} parent=11 // pred_check_branch
          %244 = sbr.rel (%p242) target = $region16
        $region15: #{tpu_custom_call.1} parent=11 // pred_region
          _
        $region16: #{tpu_custom_call.1} parent=11 // pred_fallthru
          _
        // Predicated region
        $region17: #{tpu_custom_call.1} parent=11 // pred_check
          %p245 = pneg %p117
        $region18: #{tpu_custom_call.1} parent=11 // pred_check_branch
          %247 = sbr.rel (%p245) target = $region20
        $region19: #{tpu_custom_call.1} parent=11 // pred_region
          _
        $region20: #{tpu_custom_call.1} parent=11 // pred_fallthru
          _
        // Predicated region
        $region21: #{tpu_custom_call.1} parent=11 // pred_check
          %p248 = pneg %p138
        $region22: #{tpu_custom_call.1} parent=11 // pred_check_branch
          %250 = sbr.rel (%p248) target = $region24
        $region23: #{tpu_custom_call.1} parent=11 // pred_region
          _
        $region24: #{tpu_custom_call.1} parent=11 // pred_fallthru
          _
        // Predicated region
        $region25: #{tpu_custom_call.1} parent=11 // pred_check
          %p251 = pneg %p159
        $region26: #{tpu_custom_call.1} parent=11 // pred_check_branch
          %253 = sbr.rel (%p251) target = $region28
        $region27: #{tpu_custom_call.1} parent=11 // pred_region
          _
        $region28: #{tpu_custom_call.1} parent=11 // pred_fallthru
          _
        // Predicated region
        $region29: #{tpu_custom_call.1} parent=11 // pred_check
          %p254 = pneg %p180
        $region30: #{tpu_custom_call.1} parent=11 // pred_check_branch
          %256 = sbr.rel (%p254) target = $region32
        $region31: #{tpu_custom_call.1} parent=11 // pred_region
          _
        $region32: #{tpu_custom_call.1} parent=11 // pred_fallthru
          _
        // Predicated region
        $region33: #{tpu_custom_call.1} parent=11 // pred_check
          %p257 = pneg %p201
        $region34: #{tpu_custom_call.1} parent=11 // pred_check_branch
          %259 = sbr.rel (%p257) target = $region36
        $region35: #{tpu_custom_call.1} parent=11 // pred_region
          _
        $region36: #{tpu_custom_call.1} parent=11 // pred_fallthru
          _
      $region12: #{tpu_custom_call.1} parent=5 // pred_fallthru
        _
      %p260 = scmp.lt.s32.totalorder %s23, 2
      // Predicated region
      $region37: #{tpu_custom_call.1} parent=5 // pred_check
        %p261 = pneg %p260
      $region38: #{tpu_custom_call.1} parent=5 // pred_check_branch
        %263 = sbr.rel (%p261) target = $region40
      $region39: #{tpu_custom_call.1} parent=5 // pred_region
        // Predicated region
        $region41: #{tpu_custom_call.1} parent=39 // pred_check
          %p264 = pneg %p43
        $region42: #{tpu_custom_call.1} parent=39 // pred_check_branch
          %266 = sbr.rel (%p264) target = $region44
        $region43: #{tpu_custom_call.1} parent=39 // pred_region
          %s267 = sand.u32 %s33, 1
          %s268 = scalar_lea.sflag [#allocation3], %s267
          %s269 = sand.u32 %s33, 1
          %s270 = smul.addr %s269, 8
          %s271 = scalar_lea.vmem [#allocation2], %s270
          %s273 = ssub.s32 128, 128
          %274 = vsyncadd %s268, %s273
          %s275 = smul.addr %s23, 2
          %s276 = smul.addr %s275, 64
          %s277 = scalar_lea.hbm %s0, %s276
          %s279 = sshll.u32 %s271, 4
          %s280 = int_to_ptr.vmem [resolvable:$true] %s279
          %282 = dma.hbm_to_vmem [thread:$0]  %s277, 128, %s280, %s268
        $region44: #{tpu_custom_call.1} parent=39 // pred_fallthru
          _
        // Predicated region
        $region45: #{tpu_custom_call.1} parent=39 // pred_check
          %p283 = pneg %p69
        $region46: #{tpu_custom_call.1} parent=39 // pred_check_branch
          %285 = sbr.rel (%p283) target = $region48
        $region47: #{tpu_custom_call.1} parent=39 // pred_region
          %s286 = sand.u32 %s59, 1
          %s287 = scalar_lea.sflag [#allocation6], %s286
          %s288 = sand.u32 %s59, 1
          %s289 = smul.addr %s288, 8
          %s290 = scalar_lea.vmem [#allocation5], %s289
          %s292 = ssub.s32 128, 128
          %293 = vsyncadd %s287, %s292
          %s294 = smul.addr %s23, 2
          %s295 = smul.addr %s294, 64
          %s296 = scalar_lea.hbm %s1, %s295
          %s298 = sshll.u32 %s290, 4
          %s299 = int_to_ptr.vmem [resolvable:$true] %s298
          %301 = dma.hbm_to_vmem [thread:$0]  %s296, 128, %s299, %s287
        $region48: #{tpu_custom_call.1} parent=39 // pred_fallthru
          _
      $region40: #{tpu_custom_call.1} parent=5 // pred_fallthru
        _
      %p302 = scmp.le.s32.totalorder 1, %s23
      %p303 = scmp.lt.s32.totalorder %s23, 3
      %p304 = pnand %p302, %p303
      %p305 = pneg %p304
      // Predicated region
      $region49: #{tpu_custom_call.1} parent=5 // pred_check
        _
      $region50: #{tpu_custom_call.1} parent=5 // pred_check_branch
        %307 = sbr.rel (%p304) target = $region52
      $region51: #{tpu_custom_call.1} parent=5 // pred_region
        %s308 = ssub.s32 %s23, 1
        %s309 = sand.u32 %s36, 1
        %s310 = scalar_lea.sflag [#allocation3], %s309
        %s311 = sand.u32 %s36, 1
        %s312 = smul.addr %s311, 8
        %s313 = scalar_lea.vmem [#allocation2], %s312
        // Predicated region
        $region53: #{tpu_custom_call.1} parent=51 // pred_check
          %p314 = pneg %p49
        $region54: #{tpu_custom_call.1} parent=51 // pred_check_branch
          %316 = sbr.rel (%p314) target = $region56
        $region55: #{tpu_custom_call.1} parent=51 // pred_region
          %317 = dma.done %s310, 128
        $region56: #{tpu_custom_call.1} parent=51 // pred_fallthru
          _
        %s318 = sand.u32 %s62, 1
        %s319 = scalar_lea.sflag [#allocation6], %s318
        %s320 = sand.u32 %s62, 1
        %s321 = smul.addr %s320, 8
        %s322 = scalar_lea.vmem [#allocation5], %s321
        // Predicated region
        $region57: #{tpu_custom_call.1} parent=51 // pred_check
          %p323 = pneg %p75
        $region58: #{tpu_custom_call.1} parent=51 // pred_check_branch
          %325 = sbr.rel (%p323) target = $region60
        $region59: #{tpu_custom_call.1} parent=51 // pred_region
          %326 = dma.done %s319, 128
        $region60: #{tpu_custom_call.1} parent=51 // pred_fallthru
          _
        %s327 = sand.u32 %s36, 1
        %s328 = scalar_lea.sflag [#allocation3], %s327
        %s329 = sand.u32 %s36, 1
        %s330 = smul.addr %s329, 8
        %s331 = scalar_lea.vmem [#allocation2], %s330
        %p332 = pneg %p49
        %p333 = pneg %p46
        %s334 = sand.u32 %s62, 1
        %s335 = scalar_lea.sflag [#allocation6], %s334
        %s336 = sand.u32 %s62, 1
        %s337 = smul.addr %s336, 8
        %s338 = scalar_lea.vmem [#allocation5], %s337
        %p339 = pneg %p75
        %p340 = pneg %p72
        %p341 = pneg %p96
        %p342 = pneg %p93
        %p343 = pneg %p117
        %p344 = pneg %p114
        %p345 = pneg %p138
        %p346 = pneg %p135
        %p347 = pneg %p159
        %p348 = pneg %p156
        %p349 = pneg %p180
        %p350 = pneg %p177
        %p351 = pneg %p201
        %p352 = pneg %p198
        %p353 = pneg %p227
        %p354 = pneg %p224
        %s355 = sand.u32 %s214, 1
        %s356 = scalar_lea.sflag [#allocation4], %s355
        %s357 = sand.u32 %s214, 1
        %s358 = smul.addr %s357, 8
        %s359 = scalar_lea.vmem [#allocation7], %s358
        %v360 = vld [vmem:[%s313] sm:$0xff]
        %v361 = vld [vmem:[%s322] sm:$0xff]
        %v362 = vld [vmem:[%s2] sm:$0xf]
        %v363 = vld [vmem:[%s3] sm:$0xf]
        %365 = vset.pattern.permute.xlu0 0
        %366 = vperm.xlu0 %365, %v362
        %v367 = vpop.permute.xlu0 %366
        %v370 = vlaneseq
        %v371 = vshrl.u32 %v370, 7
        %v372 = vsub.s32 0, %v371
        %v373 = vrot.slane %v360, %v372
        %v374 = vlaneseq
        %v375 = vshrl.u32 %v374, 7
        %v376 = vsub.s32 4, %v375
        %v377 = vrot.slane %v360, %v376
        %v380 = vlaneseq
        %v381 = vshrl.u32 %v380, 7
        %v382 = vsub.s32 0, %v381
        %v383 = vrot.slane %v373, %v382
        %v384 = vlaneseq
        %v385 = vshrl.u32 %v384, 7
        %v386 = vsub.s32 0, %v385
        %v387 = vrot.slane %v377, %v386
        %v388 = vmul.f32 %v367, %v383
        %v389 = vmul.f32 %v367, %v387
        %390 = vset.pattern.permute.xlu0 1
        %391 = vperm.xlu0 %390, %v362
        %v392 = vpop.permute.xlu0 %391
        %v394 = vlaneseq
        %v395 = vshrl.u32 %v394, 7
        %v396 = vsub.s32 1, %v395
        %v397 = vrot.slane %v360, %v396
        %v398 = vlaneseq
        %v399 = vshrl.u32 %v398, 7
        %v400 = vsub.s32 5, %v399
        %v401 = vrot.slane %v360, %v400
        %v404 = vlaneseq
        %v405 = vshrl.u32 %v404, 7
        %v406 = vsub.s32 1, %v405
        %v407 = vrot.slane %v397, %v406
        %v408 = vlaneseq
        %v409 = vshrl.u32 %v408, 7
        %v410 = vsub.s32 1, %v409
        %v411 = vrot.slane %v401, %v410
        %v412 = vmul.f32 %v392, %v407
        %v413 = vmul.f32 %v392, %v411
        %v414 = vadd.f32 %v388, %v412
        %v415 = vadd.f32 %v389, %v413
        %416 = vset.pattern.permute.xlu0 2
        %417 = vperm.xlu0 %416, %v362
        %v418 = vpop.permute.xlu0 %417
        %v420 = vlaneseq
        %v421 = vshrl.u32 %v420, 7
        %v422 = vsub.s32 2, %v421
        %v423 = vrot.slane %v360, %v422
        %v424 = vlaneseq
        %v425 = vshrl.u32 %v424, 7
        %v426 = vsub.s32 6, %v425
        %v427 = vrot.slane %v360, %v426
        %v430 = vlaneseq
        %v431 = vshrl.u32 %v430, 7
        %v432 = vsub.s32 2, %v431
        %v433 = vrot.slane %v423, %v432
        %v434 = vlaneseq
        %v435 = vshrl.u32 %v434, 7
        %v436 = vsub.s32 2, %v435
        %v437 = vrot.slane %v427, %v436
        %v438 = vmul.f32 %v418, %v433
        %v439 = vmul.f32 %v418, %v437
        %v440 = vadd.f32 %v414, %v438
        %v441 = vadd.f32 %v415, %v439
        %442 = vset.pattern.permute.xlu0 3
        %443 = vperm.xlu0 %442, %v362
        %v444 = vpop.permute.xlu0 %443
        %v446 = vlaneseq
        %v447 = vshrl.u32 %v446, 7
        %v448 = vsub.s32 3, %v447
        %v449 = vrot.slane %v360, %v448
        %v450 = vlaneseq
        %v451 = vshrl.u32 %v450, 7
        %v452 = vsub.s32 7, %v451
        %v453 = vrot.slane %v360, %v452
        %v456 = vlaneseq
        %v457 = vshrl.u32 %v456, 7
        %v458 = vsub.s32 3, %v457
        %v459 = vrot.slane %v449, %v458
        %v460 = vlaneseq
        %v461 = vshrl.u32 %v460, 7
        %v462 = vsub.s32 3, %v461
        %v463 = vrot.slane %v453, %v462
        %v464 = vmul.f32 %v444, %v459
        %v465 = vmul.f32 %v444, %v463
        %v466 = vadd.f32 %v440, %v464
        %v467 = vadd.f32 %v441, %v465
        %469 = vset.pattern.permute.xlu0 0
        %470 = vperm.xlu0 %469, %v363
        %v471 = vpop.permute.xlu0 %470
        %v474 = vlaneseq
        %v475 = vshrl.u32 %v474, 7
        %v476 = vsub.s32 0, %v475
        %v477 = vrot.slane %v361, %v476
        %v478 = vlaneseq
        %v479 = vshrl.u32 %v478, 7
        %v480 = vsub.s32 4, %v479
        %v481 = vrot.slane %v361, %v480
        %v484 = vlaneseq
        %v485 = vshrl.u32 %v484, 7
        %v486 = vsub.s32 0, %v485
        %v487 = vrot.slane %v477, %v486
        %v488 = vlaneseq
        %v489 = vshrl.u32 %v488, 7
        %v490 = vsub.s32 0, %v489
        %v491 = vrot.slane %v481, %v490
        %v492 = vmul.f32 %v471, %v487
        %v493 = vmul.f32 %v471, %v491
        %v494 = vadd.f32 %v466, %v492
        %v495 = vadd.f32 %v467, %v493
        %496 = vset.pattern.permute.xlu0 1
        %497 = vperm.xlu0 %496, %v363
        %v498 = vpop.permute.xlu0 %497
        %v500 = vlaneseq
        %v501 = vshrl.u32 %v500, 7
        %v502 = vsub.s32 1, %v501
        %v503 = vrot.slane %v361, %v502
        %v504 = vlaneseq
        %v505 = vshrl.u32 %v504, 7
        %v506 = vsub.s32 5, %v505
        %v507 = vrot.slane %v361, %v506
        %v510 = vlaneseq
        %v511 = vshrl.u32 %v510, 7
        %v512 = vsub.s32 1, %v511
        %v513 = vrot.slane %v503, %v512
        %v514 = vlaneseq
        %v515 = vshrl.u32 %v514, 7
        %v516 = vsub.s32 1, %v515
        %v517 = vrot.slane %v507, %v516
        %v518 = vmul.f32 %v498, %v513
        %v519 = vmul.f32 %v498, %v517
        %v520 = vadd.f32 %v494, %v518
        %v521 = vadd.f32 %v495, %v519
        %522 = vset.pattern.permute.xlu0 2
        %523 = vperm.xlu0 %522, %v363
        %v524 = vpop.permute.xlu0 %523
        %v526 = vlaneseq
        %v527 = vshrl.u32 %v526, 7
        %v528 = vsub.s32 2, %v527
        %v529 = vrot.slane %v361, %v528
        %v530 = vlaneseq
        %v531 = vshrl.u32 %v530, 7
        %v532 = vsub.s32 6, %v531
        %v533 = vrot.slane %v361, %v532
        %v536 = vlaneseq
        %v537 = vshrl.u32 %v536, 7
        %v538 = vsub.s32 2, %v537
        %v539 = vrot.slane %v529, %v538
        %v540 = vlaneseq
        %v541 = vshrl.u32 %v540, 7
        %v542 = vsub.s32 2, %v541
        %v543 = vrot.slane %v533, %v542
        %v544 = vmul.f32 %v524, %v539
        %v545 = vmul.f32 %v524, %v543
        %v546 = vadd.f32 %v520, %v544
        %v547 = vadd.f32 %v521, %v545
        %548 = vset.pattern.permute.xlu0 3
        %549 = vperm.xlu0 %548, %v363
        %v550 = vpop.permute.xlu0 %549
        %v552 = vlaneseq
        %v553 = vshrl.u32 %v552, 7
        %v554 = vsub.s32 3, %v553
        %v555 = vrot.slane %v361, %v554
        %v556 = vlaneseq
        %v557 = vshrl.u32 %v556, 7
        %v558 = vsub.s32 7, %v557
        %v559 = vrot.slane %v361, %v558
        %v562 = vlaneseq
        %v563 = vshrl.u32 %v562, 7
        %v564 = vsub.s32 3, %v563
        %v565 = vrot.slane %v555, %v564
        %v566 = vlaneseq
        %v567 = vshrl.u32 %v566, 7
        %v568 = vsub.s32 3, %v567
        %v569 = vrot.slane %v559, %v568
        %v570 = vmul.f32 %v550, %v565
        %v571 = vmul.f32 %v550, %v569
        %v572 = vadd.f32 %v546, %v570
        %v573 = vadd.f32 %v547, %v571
        %v574 = vld [vmem:[%s4] sm:$0xf]
        %576 = vset.pattern.permute.xlu0 0
        %577 = vperm.xlu0 %576, %v574
        %v578 = vpop.permute.xlu0 %577
        %v580 = vadd.f32 %v572, %v578
        %v581 = vadd.f32 %v573, %v578
        %v582 = vmul.f32 %v580, 0.5
        %v583 = vmul.f32 %v581, 0.5
        %v584 = vmul.f32 %v580, 0.70710677
        %v585 = vmul.f32 %v581, 0.70710677
        %v586 = verf.f32.pop %v584
        %v587 = verf.f32.pop %v585
        %v588 = vadd.f32 %v586, 1.0
        %v589 = vadd.f32 %v587, 1.0
        %v590 = vmul.f32 %v582, %v588
        %v591 = vmul.f32 %v583, %v589
        %593 = vrot.lane.b32.xlu0 %v591, 17
        %v594 = vpop.permute.xlu0 %593
        %597 = vrot.lane.b32.xlu0 %v590, 17
        %v598 = vpop.permute.xlu0 %597
        %vm599 = vcmask 138240
        %v600 = vsel %vm599, %v598, %v594
        %v603 = vsel %vm599, %v594, %v598
        %604 = vrot.lane.b32.xlu0 %v591, 16
        %v605 = vpop.permute.xlu0 %604
        %607 = vrot.lane.b32.xlu0 %v590, 16
        %v608 = vpop.permute.xlu0 %607
        %vm609 = vcmask 130048
        %v610 = vsel %vm609, %v608, %v605
        %v613 = vsel %vm609, %v605, %v608
        %614 = vrot.lane.b32.xlu0 %v591, 15
        %v615 = vpop.permute.xlu0 %614
        %617 = vrot.lane.b32.xlu0 %v590, 15
        %v618 = vpop.permute.xlu0 %617
        %vm619 = vcmask 121856
        %v620 = vsel %vm619, %v618, %v615
        %v623 = vsel %vm619, %v615, %v618
        %624 = vrot.lane.b32.xlu0 %v591, 1
        %v625 = vpop.permute.xlu0 %624
        %627 = vrot.lane.b32.xlu0 %v590, 1
        %v628 = vpop.permute.xlu0 %627
        %vm629 = vcmask 7168
        %v630 = vsel %vm629, %v628, %v625
        %v633 = vsel %vm629, %v625, %v628
        %634 = vrot.lane.b32.xlu0 %v590, 127
        %v635 = vpop.permute.xlu0 %634
        %636 = vrot.lane.b32.xlu0 %v591, 127
        %v637 = vpop.permute.xlu0 %636
        %vm638 = vcmask 1039360
        %v639 = vsel %vm638, %v635, %v637
        %v643 = vsel %vm638, %v637, %v635
        %644 = vrot.lane.b32.xlu0 %v590, 113
        %v645 = vpop.permute.xlu0 %644
        %646 = vrot.lane.b32.xlu0 %v591, 113
        %v647 = vpop.permute.xlu0 %646
        %vm648 = vcmask 924672
        %v649 = vsel %vm648, %v645, %v647
        %v653 = vsel %vm648, %v647, %v645
        %654 = vrot.lane.b32.xlu0 %v590, 112
        %v655 = vpop.permute.xlu0 %654
        %656 = vrot.lane.b32.xlu0 %v591, 112
        %v657 = vpop.permute.xlu0 %656
        %vm658 = vcmask 916480
        %v659 = vsel %vm658, %v655, %v657
        %v663 = vsel %vm658, %v657, %v655
        %664 = vrot.lane.b32.xlu0 %v590, 111
        %v665 = vpop.permute.xlu0 %664
        %666 = vrot.lane.b32.xlu0 %v591, 111
        %v667 = vpop.permute.xlu0 %666
        %vm668 = vcmask 908288
        %v669 = vsel %vm668, %v665, %v667
        %v673 = vsel %vm668, %v667, %v665
        %v674 = vld [vmem:[%s7] ss:$2 sm:$0x3]
        %s675 = scalar_lea.vmem %s7, 1
        %v676 = vld [vmem:[%s675] ss:$2 sm:$0x3]
        %vm677 = vcmp.eq.s32.totalorder %v674, 0
        %vm678 = vcmp.eq.s32.totalorder %v674, 15
        %vm679 = vcmp.eq.s32.totalorder %v676, 0
        %vm680 = vcmp.eq.s32.totalorder %v676, 15
        %v681 = vsel %vm679, 1, 0
        %v682 = vlaneseq
        %v683 = vshrl.u32 %v682, 7
        %v684 = vsub.s32 0, %v683
        %v685 = vrot.slane %v681, %v684
        %v686 = vlaneseq
        %v687 = vshrl.u32 %v686, 7
        %v688 = vsub.s32 1, %v687
        %v689 = vrot.slane %v681, %v688
        %vm690 = vcmp.eq.s32.totalorder %v685, 1
        %vm691 = vcmp.eq.s32.totalorder %v689, 1
        %v692 = vsel %vm690, %v623, %v603
        %v693 = vsel %vm691, %v620, %v600
        %v694 = vsel %vm680, 1, 0
        %v695 = vlaneseq
        %v696 = vshrl.u32 %v695, 7
        %v697 = vsub.s32 0, %v696
        %v698 = vrot.slane %v694, %v697
        %v699 = vlaneseq
        %v700 = vshrl.u32 %v699, 7
        %v701 = vsub.s32 1, %v700
        %v702 = vrot.slane %v694, %v701
        %vm703 = vcmp.eq.s32.totalorder %v698, 1
        %vm704 = vcmp.eq.s32.totalorder %v702, 1
        %v705 = vsel %vm703, %v603, %v623
        %v706 = vsel %vm704, %v600, %v620
        %v707 = vsel %vm690, %v639, %v633
        %v708 = vsel %vm691, %v643, %v630
        %v709 = vsel %vm703, %v633, %v639
        %v710 = vsel %vm704, %v630, %v643
        %v711 = vsel %vm690, %v669, %v649
        %v712 = vsel %vm691, %v673, %v653
        %v713 = vsel %vm703, %v649, %v669
        %v714 = vsel %vm704, %v653, %v673
        %v715 = vld [vmem:[%s5] sm:$0xf]
        %v716 = vld [vmem:[%s6] sm:$0xf]
        %v717 = vsel %vm677, 1, 0
        %v718 = vlaneseq
        %v719 = vshrl.u32 %v718, 7
        %v720 = vsub.s32 0, %v719
        %v721 = vrot.slane %v717, %v720
        %v722 = vlaneseq
        %v723 = vshrl.u32 %v722, 7
        %v724 = vsub.s32 1, %v723
        %v725 = vrot.slane %v717, %v724
        %vm726 = vcmp.eq.s32.totalorder %v721, 1
        %vm727 = vcmp.eq.s32.totalorder %v725, 1
        %v728 = vsel %vm726, %v711, %v692
        %v729 = vsel %vm727, %v712, %v693
        %731 = vset.pattern.permute.xlu0 0
        %732 = vperm.xlu0 %731, %v715
        %v733 = vpop.permute.xlu0 %732
        %v735 = vmul.f32 %v733, %v728
        %v736 = vmul.f32 %v733, %v729
        %738 = vset.pattern.permute.xlu0 0
        %739 = vperm.xlu0 %738, %v716
        %v740 = vpop.permute.xlu0 %739
        %v742 = vadd.f32 %v735, %v740
        %v743 = vadd.f32 %v736, %v740
        %v744 = vsel %vm726, %v659, %v613
        %v745 = vsel %vm727, %v663, %v610
        %746 = vset.pattern.permute.xlu0 1
        %747 = vperm.xlu0 %746, %v715
        %v748 = vpop.permute.xlu0 %747
        %v750 = vmul.f32 %v748, %v744
        %v751 = vmul.f32 %v748, %v745
        %v752 = vadd.f32 %v742, %v750
        %v753 = vadd.f32 %v743, %v751
        %v754 = vsel %vm726, %v713, %v705
        %v755 = vsel %vm727, %v714, %v706
        %756 = vset.pattern.permute.xlu0 2
        %757 = vperm.xlu0 %756, %v715
        %v758 = vpop.permute.xlu0 %757
        %v760 = vmul.f32 %v758, %v754
        %v761 = vmul.f32 %v758, %v755
        %v762 = vadd.f32 %v752, %v760
        %v763 = vadd.f32 %v753, %v761
        %764 = vset.pattern.permute.xlu0 3
        %765 = vperm.xlu0 %764, %v715
        %v766 = vpop.permute.xlu0 %765
        %v768 = vmul.f32 %v766, %v707
        %v769 = vmul.f32 %v766, %v708
        %v770 = vadd.f32 %v762, %v768
        %v771 = vadd.f32 %v763, %v769
        %772 = vset.pattern.permute.xlu0 4
        %773 = vperm.xlu0 %772, %v715
        %v774 = vpop.permute.xlu0 %773
        %v776 = vmul.f32 %v774, %v590
        %v777 = vmul.f32 %v774, %v591
        %v778 = vadd.f32 %v770, %v776
        %v779 = vadd.f32 %v771, %v777
        %780 = vset.pattern.permute.xlu0 5
        %781 = vperm.xlu0 %780, %v715
        %v782 = vpop.permute.xlu0 %781
        %v784 = vmul.f32 %v782, %v709
        %v785 = vmul.f32 %v782, %v710
        %v786 = vadd.f32 %v778, %v784
        %v787 = vadd.f32 %v779, %v785
        %v788 = vsel %vm678, 1, 0
        %v789 = vlaneseq
        %v790 = vshrl.u32 %v789, 7
        %v791 = vsub.s32 0, %v790
        %v792 = vrot.slane %v788, %v791
        %v793 = vlaneseq
        %v794 = vshrl.u32 %v793, 7
        %v795 = vsub.s32 1, %v794
        %v796 = vrot.slane %v788, %v795
        %vm797 = vcmp.eq.s32.totalorder %v792, 1
        %vm798 = vcmp.eq.s32.totalorder %v796, 1
        %v799 = vsel %vm797, %v692, %v711
        %v800 = vsel %vm798, %v693, %v712
        %801 = vset.pattern.permute.xlu0 6
        %802 = vperm.xlu0 %801, %v715
        %v803 = vpop.permute.xlu0 %802
        %v805 = vmul.f32 %v803, %v799
        %v806 = vmul.f32 %v803, %v800
        %v807 = vadd.f32 %v786, %v805
        %v808 = vadd.f32 %v787, %v806
        %v809 = vsel %vm797, %v613, %v659
        %v810 = vsel %vm798, %v610, %v663
        %811 = vset.pattern.permute.xlu0 7
        %812 = vperm.xlu0 %811, %v715
        %v813 = vpop.permute.xlu0 %812
        %v815 = vmul.f32 %v813, %v809
        %v816 = vmul.f32 %v813, %v810
        %v817 = vadd.f32 %v807, %v815
        %v818 = vadd.f32 %v808, %v816
        %v819 = vsel %vm797, %v705, %v713
        %v820 = vsel %vm798, %v706, %v714
        %821 = vset.pattern.permute.xlu0 8
        %822 = vperm.xlu0 %821, %v715
        %v823 = vpop.permute.xlu0 %822
        %v825 = vmul.f32 %v823, %v819
        %v826 = vmul.f32 %v823, %v820
        %v827 = vadd.f32 %v817, %v825
        %v828 = vadd.f32 %v818, %v826
        %v831 = vcombine.low %v827, %v828
        %833 = vst [vmem:[%s359] sm:$0xff] %v831
        %s834 = sand.u32 %s214, 1
        %s835 = scalar_lea.sflag [#allocation4], %s834
        %s836 = sand.u32 %s214, 1
        %s837 = smul.addr %s836, 8
        %s838 = scalar_lea.vmem [#allocation7], %s837
        // Predicated region
        $region61: #{tpu_custom_call.1} parent=51 // pred_check
          %p839 = pneg %p224
        $region62: #{tpu_custom_call.1} parent=51 // pred_check_branch
          %841 = sbr.rel (%p839) target = $region64
        $region63: #{tpu_custom_call.1} parent=51 // pred_region
          %s843 = ssub.s32 128, 128
          %844 = vsyncadd %s835, %s843
          %s845 = smul.addr %s28, 2
          %s846 = smul.addr %s845, 64
          %s847 = scalar_lea.hbm %s8, %s846
          %s849 = sshll.u32 %s838, 4
          %s850 = int_to_ptr.vmem [resolvable:$true] %s849
          %852 = dma.vmem_to_hbm [thread:$0]  %s850, 128, %s847, %s835
        $region64: #{tpu_custom_call.1} parent=51 // pred_fallthru
          _
      $region52: #{tpu_custom_call.1} parent=5 // pred_fallthru
        _
      %p853 = scmp.le.s32.totalorder 2, %s23
      // Predicated region
      $region65: #{tpu_custom_call.1} parent=5 // pred_check
        %p854 = pneg %p853
      $region66: #{tpu_custom_call.1} parent=5 // pred_check_branch
        %856 = sbr.rel (%p854) target = $region68
      $region67: #{tpu_custom_call.1} parent=5 // pred_region
        %s857 = ssub.s32 %s23, 2
        // Predicated region
        $region69: #{tpu_custom_call.1} parent=67 // pred_check
          %p858 = pneg %p230
        $region70: #{tpu_custom_call.1} parent=67 // pred_check_branch
          %860 = sbr.rel (%p858) target = $region72
        $region71: #{tpu_custom_call.1} parent=67 // pred_region
          %s861 = sand.u32 %s215, 1
          %s862 = scalar_lea.sflag [#allocation4], %s861
          %s863 = sand.u32 %s215, 1
          %s864 = smul.addr %s863, 8
          %s865 = scalar_lea.vmem [#allocation7], %s864
          %866 = dma.done %s862, 128
        $region72: #{tpu_custom_call.1} parent=67 // pred_fallthru
          _
      $region68: #{tpu_custom_call.1} parent=5 // pred_fallthru
        _
    $region6: #{tpu_custom_call.1} parent=1 // loop_footer
      %s27 = sadd.s32 1, %s23
    $region7: #{tpu_custom_call.1} parent=1 // loop_footer_branch
      %22 = sbr.rel target = $region3
    $region8: #{tpu_custom_call.1} parent=1 // loop_exit
      _
    %867 = vsyncpa [#allocation3], 1
    %s868 = scalar_lea.sflag [#allocation3], 1
    %869 = vsyncpa %s868, 1
    %870 = vsyncpa [#allocation6], 1
    %s871 = scalar_lea.sflag [#allocation6], 1
    %872 = vsyncpa %s871, 1
    %873 = vsyncpa [#allocation4], 1
    %s874 = scalar_lea.sflag [#allocation4], 1
    %875 = vsyncpa %s874, 1

</llo_original>
